<compile_context>
chip_gen: v7x
topology: tpu7x:2x2x1
jax: 0.10.0
libtpu: 0.0.40
codegen_flags: <defaults>
</compile_context>

<pallas_src>
import jax
import jax.numpy as jnp
from jax import lax
from jax.experimental import pallas as pl
from jax.experimental.pallas import tpu as pltpu

_NO_GRID_MAX_B = 1024   # whole-problem-in-VMEM path only for genuinely tiny batches
_TARGET_STEPS = 8       # aim for ~8 grid steps (>=2 so both v7x TCs get work)
_MIN_TILE = 512
_MAX_TILE = 8192


def _round_up(x, m):
    return ((x + m - 1) // m) * m


def mlp_kernel(x_ref, w1_ref, b1_ref, w2_ref, b2_ref, o_ref):
    # x_ref : (TB, Din)  input tile, natural row-major layout (f32 or bf16)
    # w1_ref: (H,  Din)  fc1 weight (PyTorch fc1.weight layout), VMEM-resident
    # b1_ref: (H,  1)    fc1 bias column (f32)
    # w2_ref: (H,  1)    fc2 weight column (f32)
    # b2_ref: (1,)       fc2 bias scalar in SMEM
    # o_ref : (1,  TB)   lane-dense sigmoid output (f32)
    #
    # Contract both Din axes: (H, Din) x (TB, Din) -> (H, TB), batch on lanes, f32 acc.
    h = lax.dot_general(
        w1_ref[...], x_ref[...],
        dimension_numbers=(((1,), (1,)), ((), ())),
        preferred_element_type=jnp.float32)
    h = jnp.maximum(h + b1_ref[...], 0.0)                 # bias + ReLU (lane-dense)
    # dropout == identity (eval mode)
    # fc2 with output_size == 1: multiply + sublane reduce (VPU/XLU), no second MXU push.
    z = jnp.sum(h * w2_ref[...], axis=0, keepdims=True)   # (1, TB)
    z = z + b2_ref[0]                                     # scalar bias from SMEM
    o_ref[...] = jax.nn.sigmoid(z).astype(o_ref.dtype)


def simple_binary_classifier(x, w1, b1, w2, b2, *, compute_dtype=jnp.bfloat16):
    """fc1 -> ReLU -> dropout(eval) -> fc2 -> sigmoid.

    x: (B, Din), w1: (Din, H), b1: (1, H), w2: (H, 1), b2: (1, 1). Returns (B, 1) f32.
    compute_dtype applies to the x / w1 MXU operands only (accumulation stays f32).
    """
    B, Din = x.shape
    H = w1.shape[1]
    O = w2.shape[1]
    assert O == 1, "fc2 output_size must be 1 for this head"
    cdt = jnp.dtype(compute_dtype)

    # Tiny one-time weight prep (layout plumbing, outside the hot path).
    w1_t = jnp.asarray(w1).T.astype(cdt)                      # (H, Din)
    b1_c = jnp.asarray(b1, jnp.float32).reshape(H, 1)         # (H, 1)
    w2_c = jnp.asarray(w2, jnp.float32).reshape(H, 1)         # (H, 1)
    b2_s = jnp.asarray(b2, jnp.float32).reshape(1,)           # (1,)  -> SMEM
    x_c = x.astype(cdt)                                       # natural (B, Din) layout

    if B > _NO_GRID_MAX_B:
        # Batch-tiled path: weights VMEM-resident (constant index_map), big tiles so
        # per-grid-step overhead amortizes, batch axis "parallel" for v7x megacore.
        tb = min(_MAX_TILE,
                 max(_MIN_TILE, _round_up(pl.cdiv(B, _TARGET_STEPS), 128)))
        b_pad = _round_up(B, tb)
        if b_pad != B:
            x_c = jnp.pad(x_c, ((0, b_pad - B), (0, 0)))      # zero rows, sliced off below
        out_t = pl.pallas_call(
            mlp_kernel,
            out_shape=jax.ShapeDtypeStruct((1, b_pad), jnp.float32),
            grid=(b_pad // tb,),
            in_specs=[
                pl.BlockSpec((tb, Din), lambda i: (i, 0)),    # x tile, contiguous HBM run
                pl.BlockSpec((H, Din), lambda i: (0, 0)),     # w1 resident
                pl.BlockSpec((H, 1), lambda i: (0, 0)),       # b1 resident
                pl.BlockSpec((H, 1), lambda i: (0, 0)),       # w2 resident
                pl.BlockSpec(memory_space=pltpu.MemorySpace.SMEM),  # b2 scalar
            ],
            out_specs=pl.BlockSpec((1, tb), lambda i: (0, i)),      # lane-dense output
            compiler_params=pltpu.CompilerParams(
                dimension_semantics=("parallel",)),
        )(x_c, w1_t, b1_c, w2_c, b2_s)
        out_t = out_t[:, :B]
    else:
        # Genuinely tiny batch: whole problem in VMEM, no grid / pipeline machinery.
        out_t = pl.pallas_call(
            mlp_kernel,
            out_shape=jax.ShapeDtypeStruct((1, B), jnp.float32),
            in_specs=[
                pl.BlockSpec(memory_space=pltpu.MemorySpace.VMEM),
                pl.BlockSpec(memory_space=pltpu.MemorySpace.VMEM),
                pl.BlockSpec(memory_space=pltpu.MemorySpace.VMEM),
                pl.BlockSpec(memory_space=pltpu.MemorySpace.VMEM),
                pl.BlockSpec(memory_space=pltpu.MemorySpace.SMEM),
            ],
            out_specs=pl.BlockSpec(memory_space=pltpu.MemorySpace.VMEM),
        )(x_c, w1_t, b1_c, w2_c, b2_s)

    return out_t.reshape(B, O)


def reference(x, w1, b1, w2, b2):
    h = jnp.maximum(jnp.dot(x, w1, precision=lax.Precision.HIGHEST) + b1, 0.0)
    return jax.nn.sigmoid(jnp.dot(h, w2, precision=lax.Precision.HIGHEST) + b2)


if __name__ == "__main__":
    # Module config: input_size=32, hidden_dim=64, output_size=1, dropout unused at eval.
    batch, input_size, hidden_dim, output_size = 8, 32, 64, 1
    dropout_rate = 0.5  # unused at inference

    key = jax.random.PRNGKey(0)
    kx, k1, kb1, k2, kb2, kx2, kx3 = jax.random.split(key, 7)

    x = jax.random.normal(kx, (batch, input_size), dtype=jnp.float32)
    w1 = jax.random.normal(k1, (input_size, hidden_dim), dtype=jnp.float32) * 0.1
    b1 = jax.random.normal(kb1, (1, hidden_dim), dtype=jnp.float32) * 0.1
    w2 = jax.random.normal(k2, (hidden_dim, output_size), dtype=jnp.float32) * 0.1
    b2 = jax.random.normal(kb2, (1, output_size), dtype=jnp.float32) * 0.1

    ref = reference(x, w1, b1, w2, b2)

    # 1) Tiny batch, f32 operands -> no-grid path, tight tolerance.
    out_f32 = jax.block_until_ready(
        simple_binary_classifier(x, w1, b1, w2, b2, compute_dtype=jnp.float32))
    assert out_f32.shape == (batch, output_size)
    assert jnp.allclose(out_f32, ref, atol=2e-3, rtol=2e-3), "f32 small-batch mismatch"

    # 2) Tiny batch, default bf16 matmul operands (f32 accumulation) -> looser tolerance.
    out_bf16 = jax.block_until_ready(simple_binary_classifier(x, w1, b1, w2, b2))
    assert jnp.allclose(out_bf16, ref, atol=2e-2, rtol=2e-2), "bf16 small-batch mismatch"

    # 3) Large batch (tile multiple) -> tiled path, weights resident, batch "parallel".
    big_batch = 4096
    x_big = jax.random.normal(kx2, (big_batch, input_size), dtype=jnp.float32)
    ref_big = reference(x_big, w1, b1, w2, b2)
    out_big_f32 = jax.block_until_ready(
        simple_binary_classifier(x_big, w1, b1, w2, b2, compute_dtype=jnp.float32))
    assert out_big_f32.shape == (big_batch, output_size)
    assert jnp.allclose(out_big_f32, ref_big, atol=2e-3, rtol=2e-3), "tiled f32 mismatch"
    out_big_bf16 = jax.block_until_ready(
        simple_binary_classifier(x_big, w1, b1, w2, b2))
    assert jnp.allclose(out_big_bf16, ref_big, atol=2e-2, rtol=2e-2), "tiled bf16 mismatch"

    # 4) Large ragged batch (not a multiple of 128) -> padded + tiled path.
    ragged_batch = 3000
    x_rag = jax.random.normal(kx3, (ragged_batch, input_size), dtype=jnp.float32)
    ref_rag = reference(x_rag, w1, b1, w2, b2)
    out_rag = jax.block_until_ready(
        simple_binary_classifier(x_rag, w1, b1, w2, b2, compute_dtype=jnp.float32))
    assert out_rag.shape == (ragged_batch, output_size)
    assert jnp.allclose(out_rag, ref_rag, atol=2e-3, rtol=2e-3), "ragged-batch mismatch"

    print("KERNEL_OK")
</pallas_src>

<mosaic_0001>
module attributes {stable_mosaic.version = 11 : i64} {
  func.func @mlp_kernel(%arg0: memref<8x32xf32, #tpu.memory_space<vmem>>, %arg1: memref<64x32xf32, #tpu.memory_space<vmem>>, %arg2: memref<64x1xf32, #tpu.memory_space<vmem>>, %arg3: memref<64x1xf32, #tpu.memory_space<vmem>>, %arg4: memref<1xf32, #tpu.memory_space<smem>>, %arg5: memref<1x8xf32, #tpu.memory_space<vmem>>) attributes {dimension_semantics = [], scalar_prefetch = 0 : i64, scratch_operands = 0 : i64, tpu.core_type = #tpu.core_type<tc>} {
    %c0 = arith.constant 0 : index
    %c0_0 = arith.constant 0 : index
    %0 = vector.load %arg1[%c0, %c0_0] : memref<64x32xf32, #tpu.memory_space<vmem>>, vector<64x32xf32>
    %c0_1 = arith.constant 0 : index
    %c0_2 = arith.constant 0 : index
    %1 = vector.load %arg0[%c0_1, %c0_2] : memref<8x32xf32, #tpu.memory_space<vmem>>, vector<8x32xf32>
    %cst = arith.constant dense<0.000000e+00> : vector<64x8xf32>
    %2 = tpu.matmul %0, %1, %cst {dimension_numbers = #tpu.dot_dimension_numbers<[1], [1], [0], [0], [0, 0, 1, 0], [], []>} : vector<64x32xf32>, vector<8x32xf32>, vector<64x8xf32> -> vector<64x8xf32>
    %c0_3 = arith.constant 0 : index
    %c0_4 = arith.constant 0 : index
    %3 = vector.load %arg2[%c0_3, %c0_4] : memref<64x1xf32, #tpu.memory_space<vmem>>, vector<64x1xf32>
    %4 = vector.broadcast %3 : vector<64x1xf32> to vector<64x8xf32>
    %5 = arith.addf %2, %4 : vector<64x8xf32>
    %cst_5 = arith.constant 0.000000e+00 : f32
    %6 = vector.broadcast %cst_5 : f32 to vector<64x8xf32>
    %7 = arith.maximumf %5, %6 : vector<64x8xf32>
    %c0_6 = arith.constant 0 : index
    %c0_7 = arith.constant 0 : index
    %8 = vector.load %arg3[%c0_6, %c0_7] : memref<64x1xf32, #tpu.memory_space<vmem>>, vector<64x1xf32>
    %9 = vector.broadcast %8 : vector<64x1xf32> to vector<64x8xf32>
    %10 = arith.mulf %7, %9 : vector<64x8xf32>
    %cst_8 = arith.constant dense<0.000000e+00> : vector<8xf32>
    %11 = vector.multi_reduction <add>, %10, %cst_8 [0] : vector<64x8xf32> to vector<8xf32>
    %12 = vector.shape_cast %11 : vector<8xf32> to vector<1x8xf32>
    %c0_9 = arith.constant 0 : index
    %13 = memref.load %arg4[%c0_9] : memref<1xf32, #tpu.memory_space<smem>>
    %14 = vector.broadcast %13 : f32 to vector<1x8xf32>
    %15 = arith.addf %12, %14 : vector<1x8xf32>
    %16 = arith.negf %15 : vector<1x8xf32>
    %17 = math.exp %16 : vector<1x8xf32>
    %cst_10 = arith.constant 1.000000e+00 : f32
    %18 = vector.broadcast %cst_10 : f32 to vector<1x8xf32>
    %19 = arith.addf %18, %17 : vector<1x8xf32>
    %20 = arith.divf %18, %19 : vector<1x8xf32>
    %c0_11 = arith.constant 0 : index
    %c0_12 = arith.constant 0 : index
    %21 = vector.load %arg5[%c0_11, %c0_12] : memref<1x8xf32, #tpu.memory_space<vmem>>, vector<1x8xf32>
    tpu.vector_store %arg5[%c0_11, %c0_12], %20 {strides = array<i32>} : memref<1x8xf32, #tpu.memory_space<vmem>>, vector<1x8xf32>,
    return
  }
}

</mosaic_0001>

<llo_original>
// kernel: tpu_custom_call.1
$region0: #{tpu_custom_call.1}
  #allocation0 [shape = 'u32[]', space=smem, size = 0x4, offset = 0x4, fixed_abs, tag = 'smem constant byte address 0x4 - core index']
  #allocation1 [shape = 'u32[144,128]{1,0:T(1,128)}', space=vmem, size = 0x12000, scoped, tag = 'internal scratch']
  #allocation2 [shape = 'f32[1]{0:T(128)S(6)}', space=smem, size = 0x200, scoped, tag = 'scoped memory for tpu_custom_call.1']
  %s0 = inlined_call_operand.vmem [shape: f32[8,32], index: 0, kind: input, shape index: {}]
  %s1 = inlined_call_operand.vmem [shape: f32[64,32], index: 1, kind: input, shape index: {}]
  %s2 = inlined_call_operand.vmem [shape: f32[64,1], index: 2, kind: input, shape index: {}]
  %s3 = inlined_call_operand.vmem [shape: f32[64,1], index: 3, kind: input, shape index: {}]
  %s4 = inlined_call_operand.<no memory space> [shape: f32[1], index: 4, kind: input, shape index: {}]
  %s5 = inlined_call_operand.hbm [shape: f32[1,8], index: 5, kind: output, shape index: {}]
  %s6 = sld [smem:[#allocation0]]
  $region30: #{tpu_custom_call.1} parent=0
    _
  %s8 = ssub.s32 1, %s6
  %s9 = scalar_select 0, %s8, %s6
  %10 = sst [smem:[#allocation2]] %s4
  $region1: #{tpu_custom_call.1} parent=0
    #allocation3 [shape = 'u8[512]{0}', space=vmem, size = 0x400, scoped, tag = 'output window, operand 0, single buffered']
    #allocation4 [shape = 's32[1]{0}', space=sflag, size = 0x4, scoped, tag = 'scoped memory for tpu_custom_call.1']
    %11 = vsyncpa [#allocation4], 0
    // Predicated region
    $region2: #{tpu_custom_call.1} parent=1 // pred_check
      _
    $region3: #{tpu_custom_call.1} parent=1 // pred_check_branch
      %13 = sbr.rel (0) target = $region5
    $region4: #{tpu_custom_call.1} parent=1 // pred_region
      _
    $region5: #{tpu_custom_call.1} parent=1 // pred_fallthru
      _
    // Predicated region
    $region6: #{tpu_custom_call.1} parent=1 // pred_check
      _
    $region7: #{tpu_custom_call.1} parent=1 // pred_check_branch
      %15 = sbr.rel (0) target = $region9
    $region8: #{tpu_custom_call.1} parent=1 // pred_region
      _
    $region9: #{tpu_custom_call.1} parent=1 // pred_fallthru
      _
    // Predicated region
    $region10: #{tpu_custom_call.1} parent=1 // pred_check
      _
    $region11: #{tpu_custom_call.1} parent=1 // pred_check_branch
      %17 = sbr.rel (0) target = $region13
    $region12: #{tpu_custom_call.1} parent=1 // pred_region
      _
    $region13: #{tpu_custom_call.1} parent=1 // pred_fallthru
      _
    // Predicated region
    $region14: #{tpu_custom_call.1} parent=1 // pred_check
      _
    $region15: #{tpu_custom_call.1} parent=1 // pred_check_branch
      %19 = sbr.rel (0) target = $region17
    $region16: #{tpu_custom_call.1} parent=1 // pred_region
      _
    $region17: #{tpu_custom_call.1} parent=1 // pred_fallthru
      _
    // Predicated region
    $region18: #{tpu_custom_call.1} parent=1 // pred_check
      _
    $region19: #{tpu_custom_call.1} parent=1 // pred_check_branch
      %21 = sbr.rel (0) target = $region21
    $region20: #{tpu_custom_call.1} parent=1 // pred_region
      _
    $region21: #{tpu_custom_call.1} parent=1 // pred_fallthru
      _
    %v22 = vld [vmem:[%s1] sm:$0xff]
    %v23 = vld [vmem:[%s1 + $0x8] sm:$0xff]
    %v24 = vld [vmem:[%s1 + $0x10] sm:$0xff]
    %v25 = vld [vmem:[%s1 + $0x18] sm:$0xff]
    %v26 = vld [vmem:[%s1 + $0x20] sm:$0xff]
    %v27 = vld [vmem:[%s1 + $0x28] sm:$0xff]
    %v28 = vld [vmem:[%s1 + $0x30] sm:$0xff]
    %v29 = vld [vmem:[%s1 + $0x38] sm:$0xff]
    %v30 = vld [vmem:[%s0] sm:$0xff]
    %v31 = vld [vmem:[%s2] sm:$0xff]
    %v32 = vld [vmem:[%s2 + $0x8] sm:$0xff]
    %v33 = vld [vmem:[%s2 + $0x10] sm:$0xff]
    %v34 = vld [vmem:[%s2 + $0x18] sm:$0xff]
    %v35 = vld [vmem:[%s2 + $0x20] sm:$0xff]
    %v36 = vld [vmem:[%s2 + $0x28] sm:$0xff]
    %v37 = vld [vmem:[%s2 + $0x30] sm:$0xff]
    %v38 = vld [vmem:[%s2 + $0x38] sm:$0xff]
    %40 = vset.pattern.permute.xlu0 0
    %41 = vperm.xlu0 %40, %v31
    %v42 = vpop.permute.xlu0 %41
    %45 = vset.pattern.permute.xlu0 0
    %46 = vperm.xlu0 %45, %v32
    %v47 = vpop.permute.xlu0 %46
    %50 = vset.pattern.permute.xlu0 0
    %51 = vperm.xlu0 %50, %v33
    %v52 = vpop.permute.xlu0 %51
    %55 = vset.pattern.permute.xlu0 0
    %56 = vperm.xlu0 %55, %v34
    %v57 = vpop.permute.xlu0 %56
    %60 = vset.pattern.permute.xlu0 0
    %61 = vperm.xlu0 %60, %v35
    %v62 = vpop.permute.xlu0 %61
    %65 = vset.pattern.permute.xlu0 0
    %66 = vperm.xlu0 %65, %v36
    %v67 = vpop.permute.xlu0 %66
    %70 = vset.pattern.permute.xlu0 0
    %71 = vperm.xlu0 %70, %v37
    %v72 = vpop.permute.xlu0 %71
    %75 = vset.pattern.permute.xlu0 0
    %76 = vperm.xlu0 %75, %v38
    %v77 = vpop.permute.xlu0 %76
    %vm79 = vcmask 261120
    %v81 = vsel %vm79, %v22, 0
    %v84 = vsel %vm79, %v23, 0
    %v87 = vsel %vm79, %v24, 0
    %v90 = vsel %vm79, %v25, 0
    %v93 = vsel %vm79, %v26, 0
    %v96 = vsel %vm79, %v27, 0
    %v99 = vsel %vm79, %v28, 0
    %v102 = vsel %vm79, %v29, 0
    %v105 = vsel %vm79, %v30, 0
    %107 = vmatprep.subr.mxu0 0.0
    %108 = vmatpush1.xpose.msra.mxu0 %v105
    %109 = vmatprep.subr.mxu0 0.0
    %110 = vmatpush1.xpose.msra.mxu0 0.0
    %111 = vmatprep.subr.mxu0 0.0
    %112 = vmatpush1.xpose.msra.mxu0 0.0
    %113 = vmatprep.subr.mxu0 0.0
    %114 = vmatpush1.xpose.msra.mxu0 0.0
    %115 = vmatprep.subr.mxu0 0.0
    %116 = vmatpush1.xpose.msra.mxu0 0.0
    %117 = vmatprep.subr.mxu0 0.0
    %118 = vmatpush1.xpose.msra.mxu0 0.0
    %119 = vmatprep.subr.mxu0 0.0
    %120 = vmatpush1.xpose.msra.mxu0 0.0
    %121 = vmatprep.subr.mxu0 0.0
    %122 = vmatpush1.xpose.msra.mxu0 0.0
    %123 = vmatprep.subr.mxu0 0.0
    %124 = vmatpush1.xpose.msra.mxu0 0.0
    %125 = vmatprep.subr.mxu0 0.0
    %126 = vmatpush1.xpose.msra.mxu0 0.0
    %127 = vmatprep.subr.mxu0 0.0
    %128 = vmatpush1.xpose.msra.mxu0 0.0
    %129 = vmatprep.subr.mxu0 0.0
    %130 = vmatpush1.xpose.msra.mxu0 0.0
    %131 = vmatprep.subr.mxu0 0.0
    %132 = vmatpush1.xpose.msra.mxu0 0.0
    %133 = vmatprep.subr.mxu0 0.0
    %134 = vmatpush1.xpose.msra.mxu0 0.0
    %135 = vmatprep.subr.mxu0 0.0
    %136 = vmatpush1.xpose.msra.mxu0 0.0
    %137 = vmatprep.subr.mxu0 0.0
    %138 = vmatpush1.xpose.msra.mxu0 0.0
    %139 = vmatprep.subr.mxu0 0.0
    %140 = vmatpush1.xpose.msra.mxu0 0.0
    %141 = vmatprep.subr.mxu0 0.0
    %142 = vmatpush1.xpose.msra.mxu0 0.0
    %143 = vmatprep.subr.mxu0 0.0
    %144 = vmatpush1.xpose.msra.mxu0 0.0
    %145 = vmatprep.subr.mxu0 0.0
    %146 = vmatpush1.xpose.msra.mxu0 0.0
    %147 = vmatprep.subr.mxu0 0.0
    %148 = vmatpush1.xpose.msra.mxu0 0.0
    %149 = vmatprep.subr.mxu0 0.0
    %150 = vmatpush1.xpose.msra.mxu0 0.0
    %151 = vmatprep.subr.mxu0 0.0
    %152 = vmatpush1.xpose.msra.mxu0 0.0
    %153 = vmatprep.subr.mxu0 0.0
    %154 = vmatpush1.xpose.msra.mxu0 0.0
    %155 = vmatprep.subr.mxu0 0.0
    %156 = vmatpush1.xpose.msra.mxu0 0.0
    %157 = vmatprep.subr.mxu0 0.0
    %158 = vmatpush1.xpose.msra.mxu0 0.0
    %159 = vmatprep.subr.mxu0 0.0
    %160 = vmatpush1.xpose.msra.mxu0 0.0
    %161 = vmatprep.subr.mxu0 0.0
    %162 = vmatpush1.xpose.msra.mxu0 0.0
    %163 = vmatprep.subr.mxu0 0.0
    %164 = vmatpush1.xpose.msra.mxu0 0.0
    %165 = vmatprep.subr.mxu0 0.0
    %166 = vmatpush1.xpose.msra.mxu0 0.0
    %167 = vmatprep.subr.mxu0 0.0
    %168 = vmatpush1.xpose.msra.mxu0 0.0
    %169 = vmatprep.subr.mxu0 0.0
    %170 = vmatpush1.xpose.msra.mxu0 0.0
    %171 = vmatprep.mubr.f32.mxu0 0.0
    %172 = vmatmul.mubr.f32.gmra.mrb[0].mxu0 %v81
    %v173 = vpop.f32.mrb[0].mxu0
    %v174 = vadd.f32 %v42, %v173
    %v175 = vpop.f32.mrb[0].mxu0
    %176 = vmatprep.mubr.f32.mxu0 0.0
    %177 = vmatmul.mubr.f32.gmra.mrb[0].mxu0 %v84
    %v178 = vpop.f32.mrb[0].mxu0
    %v179 = vadd.f32 %v47, %v178
    %v180 = vpop.f32.mrb[0].mxu0
    %181 = vmatprep.mubr.f32.mxu0 0.0
    %182 = vmatmul.mubr.f32.gmra.mrb[0].mxu0 %v87
    %v183 = vpop.f32.mrb[0].mxu0
    %v184 = vadd.f32 %v52, %v183
    %v185 = vpop.f32.mrb[0].mxu0
    %186 = vmatprep.mubr.f32.mxu0 0.0
    %187 = vmatmul.mubr.f32.gmra.mrb[0].mxu0 %v90
    %v188 = vpop.f32.mrb[0].mxu0
    %v189 = vadd.f32 %v57, %v188
    %v190 = vpop.f32.mrb[0].mxu0
    %191 = vmatprep.mubr.f32.mxu0 0.0
    %192 = vmatmul.mubr.f32.gmra.mrb[0].mxu0 %v93
    %v193 = vpop.f32.mrb[0].mxu0
    %v194 = vadd.f32 %v62, %v193
    %v195 = vpop.f32.mrb[0].mxu0
    %196 = vmatprep.mubr.f32.mxu0 0.0
    %197 = vmatmul.mubr.f32.gmra.mrb[0].mxu0 %v96
    %v198 = vpop.f32.mrb[0].mxu0
    %v199 = vadd.f32 %v67, %v198
    %v200 = vpop.f32.mrb[0].mxu0
    %201 = vmatprep.mubr.f32.mxu0 0.0
    %202 = vmatmul.mubr.f32.gmra.mrb[0].mxu0 %v99
    %v203 = vpop.f32.mrb[0].mxu0
    %v204 = vadd.f32 %v72, %v203
    %v205 = vpop.f32.mrb[0].mxu0
    %206 = vmatprep.mubr.f32.mxu0 0.0
    %207 = vmatmul.mubr.f32.gmra.mrb[0].mxu0 %v102
    %v208 = vpop.f32.mrb[0].mxu0
    %v209 = vadd.f32 %v77, %v208
    %v210 = vpop.f32.mrb[0].mxu0
    %211 = vdwg.mxu0
    %v212 = vmax.f32 %v174, 0.0
    %v213 = vmax.f32 %v179, 0.0
    %v214 = vmax.f32 %v184, 0.0
    %v215 = vmax.f32 %v189, 0.0
    %v216 = vmax.f32 %v194, 0.0
    %v217 = vmax.f32 %v199, 0.0
    %v218 = vmax.f32 %v204, 0.0
    %v219 = vmax.f32 %v209, 0.0
    %v220 = vld [vmem:[%s3] sm:$0xff]
    %v221 = vld [vmem:[%s3 + $0x8] sm:$0xff]
    %v222 = vld [vmem:[%s3 + $0x10] sm:$0xff]
    %v223 = vld [vmem:[%s3 + $0x18] sm:$0xff]
    %v224 = vld [vmem:[%s3 + $0x20] sm:$0xff]
    %v225 = vld [vmem:[%s3 + $0x28] sm:$0xff]
    %v226 = vld [vmem:[%s3 + $0x30] sm:$0xff]
    %v227 = vld [vmem:[%s3 + $0x38] sm:$0xff]
    %229 = vset.pattern.permute.xlu0 0
    %230 = vperm.xlu0 %229, %v220
    %v231 = vpop.permute.xlu0 %230
    %234 = vset.pattern.permute.xlu0 0
    %235 = vperm.xlu0 %234, %v221
    %v236 = vpop.permute.xlu0 %235
    %239 = vset.pattern.permute.xlu0 0
    %240 = vperm.xlu0 %239, %v222
    %v241 = vpop.permute.xlu0 %240
    %244 = vset.pattern.permute.xlu0 0
    %245 = vperm.xlu0 %244, %v223
    %v246 = vpop.permute.xlu0 %245
    %249 = vset.pattern.permute.xlu0 0
    %250 = vperm.xlu0 %249, %v224
    %v251 = vpop.permute.xlu0 %250
    %254 = vset.pattern.permute.xlu0 0
    %255 = vperm.xlu0 %254, %v225
    %v256 = vpop.permute.xlu0 %255
    %259 = vset.pattern.permute.xlu0 0
    %260 = vperm.xlu0 %259, %v226
    %v261 = vpop.permute.xlu0 %260
    %264 = vset.pattern.permute.xlu0 0
    %265 = vperm.xlu0 %264, %v227
    %v266 = vpop.permute.xlu0 %265
    %v268 = vmul.f32 %v212, %v231
    %v269 = vmul.f32 %v213, %v236
    %v270 = vmul.f32 %v214, %v241
    %v271 = vmul.f32 %v215, %v246
    %v272 = vmul.f32 %v216, %v251
    %v273 = vmul.f32 %v217, %v256
    %v274 = vmul.f32 %v218, %v261
    %v275 = vmul.f32 %v219, %v266
    %vm276 = vcmask 64512
    %v277 = vsel %vm276, %v268, 0.0
    %v278 = vsel %vm276, %v269, 0.0
    %v279 = vadd.f32 %v277, %v278
    %v280 = vsel %vm276, %v270, 0.0
    %v281 = vadd.f32 %v279, %v280
    %v282 = vsel %vm276, %v271, 0.0
    %v283 = vadd.f32 %v281, %v282
    %v284 = vsel %vm276, %v272, 0.0
    %v285 = vadd.f32 %v283, %v284
    %v286 = vsel %vm276, %v273, 0.0
    %v287 = vadd.f32 %v285, %v286
    %v288 = vsel %vm276, %v274, 0.0
    %v289 = vadd.f32 %v287, %v288
    %v290 = vsel %vm276, %v275, 0.0
    %v291 = vadd.f32 %v289, %v290
    %v292 = vrot.slane %v291, 4
    %v293 = vadd.f32 %v291, %v292
    %v294 = vrot.slane %v293, 2
    %v295 = vadd.f32 %v293, %v294
    %v296 = vrot.slane %v295, 1
    %v297 = vadd.f32 %v295, %v296
    %s298 = sld [smem:[#allocation2]]
    %v299 = vstv %s298
    %v300 = vadd.f32 %v297, %v299
    %v301 = vxor.u32 %v300, 2147483648
    %v302 = vmul.f32 %v301, 1.442695
    %v303 = vpow.pop %v302
    %v304 = vadd.f32 %v303, 1.0
    %v305 = vrcp.pop %v304
    %v306 = vmul.f32 1.0, %v305
    %vm307 = vcmask 57344
    %308 = vst.msk [vmem:[#allocation3] sm:$0x1] %vm307, %v306
    // Predicated region
    $region22: #{tpu_custom_call.1} parent=1 // pred_check
      _
    $region23: #{tpu_custom_call.1} parent=1 // pred_check_branch
      %310 = sbr.rel (0) target = $region25
    $region24: #{tpu_custom_call.1} parent=1 // pred_region
      %s312 = ssub.s32 16, 16
      %313 = vsyncadd [#allocation4], %s312
      %s315 = sshll.u32 [#allocation3], 4
      %s316 = int_to_ptr.vmem [resolvable:$true] %s315
      %318 = dma.vmem_to_hbm [thread:$0]  %s316, 16, %s5, [#allocation4]
    $region25: #{tpu_custom_call.1} parent=1 // pred_fallthru
      _
    // Predicated region
    $region26: #{tpu_custom_call.1} parent=1 // pred_check
      _
    $region27: #{tpu_custom_call.1} parent=1 // pred_check_branch
      %320 = sbr.rel (0) target = $region29
    $region28: #{tpu_custom_call.1} parent=1 // pred_region
      %321 = dma.done [#allocation4], 16
    $region29: #{tpu_custom_call.1} parent=1 // pred_fallthru
      _
    %322 = vsyncpa [#allocation4], 1

</llo_original>
